<compile_context>
chip_gen: v5e
topology: v5e:2x2
jax: 0.10.0
libtpu: 0.0.40
codegen_flags: <defaults>
</compile_context>

<pallas_src>
import jax
import jax.numpy as jnp
from jax import lax
from jax.experimental import pallas as pl
from jax.experimental.pallas import tpu as pltpu


def _round_up(x, m):
    return ((x + m - 1) // m) * m


# ----------------------------- Pallas kernel ------------------------------ #
def fused_kernel(
    ids_ref,                                  # (TB, 1) int32 object class ids
    act_ref,                                  # (TB, A) f32 layer activations
    obj_tbl_ref,                              # (NC_pad, F) f32 folded object branch
    w_a1_ref, w_a2_ref,                       # activation branch weights (bf16)
    wf_top_ref, wf_bot_ref,                   # fusion weight halves (F, F) bf16
    w_out_ref,                                # output head (F, S_pad) bf16
    bias_ref,                                 # packed biases (8, Wb) f32
    out_ref,                                  # (TB, S_pad) f32
):
    f32 = jnp.float32
    bf16 = jnp.bfloat16
    TB = ids_ref.shape[0]
    NC = obj_tbl_ref.shape[0]
    H = w_a1_ref.shape[1]
    F = w_a2_ref.shape[1]
    S = w_out_ref.shape[1]

    # packed biases (static slices, zero runtime cost)
    b_a1 = bias_ref[0:1, :H]
    b_a2 = bias_ref[1:2, :F]
    b_f = bias_ref[2:3, :F]
    b_out = bias_ref[3:4, :S]

    # ---- object branch: folded table lookup via exact one-hot row-select ----
    ids = ids_ref[...]                                            # (TB, 1) i32
    iota = lax.broadcasted_iota(jnp.int32, (TB, NC), 1)           # (TB, NC)
    onehot = (iota == ids).astype(f32)                            # exact 0/1
    obj = jnp.dot(onehot, obj_tbl_ref[...], preferred_element_type=f32)  # (TB, F)

    # ---- start fusion accumulation with the obj half (shrinks live ranges) --
    fusion = jnp.dot(obj.astype(bf16), wf_top_ref[...],
                     preferred_element_type=f32)

    # ---- activation branch: Linear -> ReLU -> Linear -> ReLU (dropout = id) -
    act = act_ref[...].astype(bf16)                               # on-chip cast
    act = jnp.dot(act, w_a1_ref[...], preferred_element_type=f32) + b_a1
    act = jnp.maximum(act, 0.0)
    act = jnp.dot(act.astype(bf16), w_a2_ref[...], preferred_element_type=f32) + b_a2
    act = jnp.maximum(act, 0.0)

    # ---- fusion: obj@Wf_top + act@Wf_bot == cat([obj, act]) @ Wf ------------
    fusion = fusion + jnp.dot(act.astype(bf16), wf_bot_ref[...],
                              preferred_element_type=f32) + b_f
    fusion = jnp.maximum(fusion, 0.0)

    # ---- output head (lane-dense padded store) ------------------------------
    out_ref[...] = (
        jnp.dot(fusion.astype(bf16), w_out_ref[...], preferred_element_type=f32)
        + b_out
    ).astype(out_ref.dtype)


# ------------------------------ JAX wrapper -------------------------------- #
def multimodal_spike_predictor(obj_input, layer_activation, params, spike_dim):
    """obj_input: int32 (B,), layer_activation: f32 (B, A) -> f32 (B, spike_dim)."""
    obj_tbl = params["obj_table"]
    NC_pad, F = obj_tbl.shape
    A = layer_activation.shape[1]
    H = params["w_a1"].shape[1]
    S_pad = params["w_out"].shape[1]
    B = obj_input.shape[0]

    # batch tile: multiple of 16; split into >=2 grid steps when possible so
    # dimension_semantics=("parallel",) can shard across both v7x TensorCores;
    # cap at 512 (weights stay VMEM-resident; per-step tiles are a few 100 KB).
    B16 = _round_up(max(B, 1), 16)
    if B16 >= 32:
        TB = min(_round_up(B16 // 2, 16), 512)
    else:
        TB = B16
    B_pad = _round_up(B, TB)

    ids = obj_input.astype(jnp.int32).reshape(B, 1)
    act = layer_activation.astype(jnp.float32)     # kernel casts to bf16 on-chip
    pad_rows = B_pad - B
    if pad_rows:
        ids = jnp.pad(ids, ((0, pad_rows), (0, 0)))
        act = jnp.pad(act, ((0, pad_rows), (0, 0)))

    row = lambda i: (i, 0)        # batch-tiled arrays
    const = lambda i: (0, 0)      # VMEM-resident weights / biases

    out = pl.pallas_call(
        fused_kernel,
        out_shape=jax.ShapeDtypeStruct((B_pad, S_pad), jnp.float32),
        grid_spec=pltpu.PrefetchScalarGridSpec(
            num_scalar_prefetch=0,
            grid=(B_pad // TB,),
            in_specs=[
                pl.BlockSpec((TB, 1), row),             # object class ids
                pl.BlockSpec((TB, A), row),             # layer activations (f32)
                pl.BlockSpec((NC_pad, F), const),       # folded object table
                pl.BlockSpec((A, H), const),            # w_a1
                pl.BlockSpec((H, F), const),            # w_a2
                pl.BlockSpec((F, F), const),            # wf_top (obj half)
                pl.BlockSpec((F, F), const),            # wf_bot (act half)
                pl.BlockSpec((F, S_pad), const),        # w_out (padded)
                pl.BlockSpec(params["bias"].shape, const),  # packed biases
            ],
            out_specs=pl.BlockSpec((TB, S_pad), row),
        ),
        compiler_params=pltpu.CompilerParams(
            dimension_semantics=("parallel",)),
    )(ids, act, obj_tbl,
      params["w_a1"], params["w_a2"],
      params["wf_top"], params["wf_bot"],
      params["w_out"], params["bias"])

    # TODO(synk): downstream consumers that accept the lane-dense padded buffer
    # can skip this slice (it is a separate, non-lane-aligned XLA pass).
    return out[:B, :spike_dim]


# --------------------------- deterministic params --------------------------- #
def init_params(key, num_classes, layer_activation_dim, embedding_dim,
                hidden_dim, fusion_dim, spike_dim):
    ks = jax.random.split(key, 16)
    f32, bf16 = jnp.float32, jnp.bfloat16
    S_pad = _round_up(spike_dim, 128)
    NC_pad = _round_up(num_classes, 128)

    def lin_w(k, fan_in, fan_out):
        bound = 1.0 / jnp.sqrt(float(fan_in))
        return jax.random.uniform(k, (fan_in, fan_out), f32, -bound, bound)

    def lin_b(k, fan_in, fan_out):
        bound = 1.0 / jnp.sqrt(float(fan_in))
        return jax.random.uniform(k, (fan_out,), f32, -bound, bound)

    params = {}

    # ---- object branch (class-only) folded into a single (NC, F) table ------
    # Computed with the same bf16-weight / f32-accumulate chain the unfused
    # kernel used; stored in f32 so the fold adds no extra rounding.
    emb = jax.random.normal(ks[0], (num_classes, embedding_dim), f32)
    w_o1 = lin_w(ks[1], embedding_dim, hidden_dim)
    b_o1 = lin_b(ks[2], embedding_dim, hidden_dim)
    w_o2 = lin_w(ks[3], hidden_dim, fusion_dim)
    b_o2 = lin_b(ks[4], hidden_dim, fusion_dim)
    t = jnp.dot(emb.astype(bf16), w_o1.astype(bf16),
                preferred_element_type=f32) + b_o1
    t = jnp.maximum(t, 0.0)
    t = jnp.dot(t.astype(bf16), w_o2.astype(bf16),
                preferred_element_type=f32) + b_o2
    t = jnp.maximum(t, 0.0)
    params["obj_table"] = jnp.pad(t, ((0, NC_pad - num_classes), (0, 0)))  # f32

    # ---- activation branch ---------------------------------------------------
    w_a1 = lin_w(ks[5], layer_activation_dim, hidden_dim)
    b_a1 = lin_b(ks[6], layer_activation_dim, hidden_dim)
    w_a2 = lin_w(ks[7], hidden_dim, fusion_dim)
    b_a2 = lin_b(ks[8], hidden_dim, fusion_dim)

    # ---- fusion_fc: torch weight (F, 2F) stored transposed (2F, F), split ----
    wf = lin_w(ks[9], 2 * fusion_dim, fusion_dim)
    b_f = lin_b(ks[10], 2 * fusion_dim, fusion_dim)

    # ---- output head, zero-padded to a lane-dense width ----------------------
    w_out = jnp.pad(lin_w(ks[11], fusion_dim, spike_dim),
                    ((0, 0), (0, S_pad - spike_dim)))
    b_out = jnp.pad(lin_b(ks[12], fusion_dim, spike_dim), (0, S_pad - spike_dim))

    params["w_a1"] = w_a1.astype(bf16)
    params["w_a2"] = w_a2.astype(bf16)
    params["wf_top"] = wf[:fusion_dim].astype(bf16)      # multiplies obj half
    params["wf_bot"] = wf[fusion_dim:].astype(bf16)      # multiplies act half
    params["w_out"] = w_out.astype(bf16)

    # pack the four remaining biases into one lane-dense (8, Wb) f32 array
    W_b = _round_up(max(hidden_dim, fusion_dim, S_pad), 128)
    bias = jnp.zeros((8, W_b), f32)
    bias = bias.at[0, :hidden_dim].set(b_a1)
    bias = bias.at[1, :fusion_dim].set(b_a2)
    bias = bias.at[2, :fusion_dim].set(b_f)
    bias = bias.at[3, :S_pad].set(b_out)
    params["bias"] = bias
    return params


# ------------------------------ pure-JAX ref -------------------------------- #
def reference_forward(obj_input, layer_activation, params, spike_dim):
    """Same math as the torch module (inference) with the same bf16 weight /
    f32 accumulation chain; uses a gather + concat-matmul path so it checks
    the kernel's one-hot select and split-Wf accumulation independently."""
    bf16, f32 = jnp.bfloat16, jnp.float32
    H = params["w_a1"].shape[1]
    F = params["w_a2"].shape[1]
    S_pad = params["w_out"].shape[1]
    b = params["bias"]
    relu = lambda x: jnp.maximum(x, 0.0)
    dot = lambda x, w: jnp.dot(x.astype(bf16), w, preferred_element_type=f32)

    obj = params["obj_table"][obj_input]                          # exact gather
    act = relu(dot(layer_activation, params["w_a1"]) + b[0:1, :H])
    act = relu(dot(act, params["w_a2"]) + b[1:2, :F])
    wf_full = jnp.concatenate([params["wf_top"], params["wf_bot"]], axis=0)
    combined = jnp.concatenate([obj.astype(bf16), act.astype(bf16)], axis=1)
    fusion = relu(jnp.dot(combined, wf_full, preferred_element_type=f32)
                  + b[2:3, :F])
    out = dot(fusion, params["w_out"]) + b[3:4, :S_pad]
    return out[:, :spike_dim]


if __name__ == "__main__":
    # Small but representative shapes (module defaults, scaled-down act dim).
    B = 8
    num_classes = 16
    layer_activation_dim = 256
    embedding_dim = 64
    hidden_dim = 128
    fusion_dim = 256
    spike_dim = 168

    key = jax.random.PRNGKey(0)
    k_params, k_obj, k_act = jax.random.split(key, 3)

    params = init_params(k_params, num_classes, layer_activation_dim,
                         embedding_dim, hidden_dim, fusion_dim, spike_dim)

    obj_input = jax.random.randint(k_obj, (B,), 0, num_classes, dtype=jnp.int32)
    layer_activation = jax.random.normal(
        k_act, (B, layer_activation_dim), jnp.float32)

    out = multimodal_spike_predictor(obj_input, layer_activation, params, spike_dim)
    out = jax.block_until_ready(out)

    ref = reference_forward(obj_input, layer_activation, params, spike_dim)
    assert out.shape == (B, spike_dim), out.shape
    assert jnp.allclose(out, ref, atol=2e-2, rtol=2e-2), \
        float(jnp.max(jnp.abs(out - ref)))

    print("KERNEL_OK")
</pallas_src>

<mosaic_0001>
module attributes {stable_mosaic.version = 11 : i64} {
  func.func @fused_kernel(%arg0: i32, %arg1: memref<16x1xi32, #tpu.memory_space<vmem>>, %arg2: memref<16x256xf32, #tpu.memory_space<vmem>>, %arg3: memref<128x256xf32, #tpu.memory_space<vmem>>, %arg4: memref<256x128xbf16, #tpu.memory_space<vmem>>, %arg5: memref<128x256xbf16, #tpu.memory_space<vmem>>, %arg6: memref<256x256xbf16, #tpu.memory_space<vmem>>, %arg7: memref<256x256xbf16, #tpu.memory_space<vmem>>, %arg8: memref<256x256xbf16, #tpu.memory_space<vmem>>, %arg9: memref<8x256xf32, #tpu.memory_space<vmem>>, %arg10: memref<16x256xf32, #tpu.memory_space<vmem>>) attributes {dimension_semantics = [#tpu.dimension_semantics<parallel>], iteration_bounds = array<i64: 1>, scalar_prefetch = 0 : i64, scratch_operands = 0 : i64, tpu.core_type = #tpu.core_type<tc>, window_params = [{transform_indices = @transform_0, window_bounds = array<i64: 16, 1>}, {transform_indices = @transform_1, window_bounds = array<i64: 16, 256>}, {pipeline_mode = #tpu.pipeline_mode<synchronous>, transform_indices = @transform_2, window_bounds = array<i64: 128, 256>}, {pipeline_mode = #tpu.pipeline_mode<synchronous>, transform_indices = @transform_3, window_bounds = array<i64: 256, 128>}, {pipeline_mode = #tpu.pipeline_mode<synchronous>, transform_indices = @transform_4, window_bounds = array<i64: 128, 256>}, {pipeline_mode = #tpu.pipeline_mode<synchronous>, transform_indices = @transform_5, window_bounds = array<i64: 256, 256>}, {pipeline_mode = #tpu.pipeline_mode<synchronous>, transform_indices = @transform_6, window_bounds = array<i64: 256, 256>}, {pipeline_mode = #tpu.pipeline_mode<synchronous>, transform_indices = @transform_7, window_bounds = array<i64: 256, 256>}, {pipeline_mode = #tpu.pipeline_mode<synchronous>, transform_indices = @transform_8, window_bounds = array<i64: 8, 256>}, {transform_indices = @transform_9, window_bounds = array<i64: 16, 256>}]} {
    %c0 = arith.constant 0 : index
    %c0_0 = arith.constant 0 : index
    %0 = vector.load %arg9[%c0, %c0_0] : memref<8x256xf32, #tpu.memory_space<vmem>>, vector<1x128xf32>
    %c1 = arith.constant 1 : index
    %c0_1 = arith.constant 0 : index
    %1 = vector.load %arg9[%c1, %c0_1] : memref<8x256xf32, #tpu.memory_space<vmem>>, vector<1x256xf32>
    %c2 = arith.constant 2 : index
    %c0_2 = arith.constant 0 : index
    %2 = vector.load %arg9[%c2, %c0_2] : memref<8x256xf32, #tpu.memory_space<vmem>>, vector<1x256xf32>
    %c3 = arith.constant 3 : index
    %c0_3 = arith.constant 0 : index
    %3 = vector.load %arg9[%c3, %c0_3] : memref<8x256xf32, #tpu.memory_space<vmem>>, vector<1x256xf32>
    %c0_4 = arith.constant 0 : index
    %c0_5 = arith.constant 0 : index
    %4 = vector.load %arg1[%c0_4, %c0_5] : memref<16x1xi32, #tpu.memory_space<vmem>>, vector<16x1xi32>
    %5 = tpu.iota {dimensions = array<i32: 1>} : vector<16x128xi32>
    %6 = vector.broadcast %4 : vector<16x1xi32> to vector<16x128xi32>
    %7 = arith.cmpi eq, %5, %6 : vector<16x128xi32>
    %8 = arith.extui %7 : vector<16x128xi1> to vector<16x128xi32>
    %9 = arith.sitofp %8 : vector<16x128xi32> to vector<16x128xf32>
    %c0_6 = arith.constant 0 : index
    %c0_7 = arith.constant 0 : index
    %10 = vector.load %arg3[%c0_6, %c0_7] : memref<128x256xf32, #tpu.memory_space<vmem>>, vector<128x256xf32>
    %cst = arith.constant dense<0.000000e+00> : vector<16x256xf32>
    %11 = tpu.matmul %9, %10, %cst {dimension_numbers = #tpu.dot_dimension_numbers<[1], [0], [0], [1], [0, 0, 1, 1], [], []>} : vector<16x128xf32>, vector<128x256xf32>, vector<16x256xf32> -> vector<16x256xf32>
    %12 = arith.truncf %11 : vector<16x256xf32> to vector<16x256xbf16>
    %c0_8 = arith.constant 0 : index
    %c0_9 = arith.constant 0 : index
    %13 = vector.load %arg6[%c0_8, %c0_9] : memref<256x256xbf16, #tpu.memory_space<vmem>>, vector<256x256xbf16>
    %cst_10 = arith.constant dense<0.000000e+00> : vector<16x256xf32>
    %14 = tpu.matmul %12, %13, %cst_10 {dimension_numbers = #tpu.dot_dimension_numbers<[1], [0], [0], [1], [0, 0, 1, 1], [], []>} : vector<16x256xbf16>, vector<256x256xbf16>, vector<16x256xf32> -> vector<16x256xf32>
    %c0_11 = arith.constant 0 : index
    %c0_12 = arith.constant 0 : index
    %15 = vector.load %arg2[%c0_11, %c0_12] : memref<16x256xf32, #tpu.memory_space<vmem>>, vector<16x256xf32>
    %16 = arith.truncf %15 : vector<16x256xf32> to vector<16x256xbf16>
    %c0_13 = arith.constant 0 : index
    %c0_14 = arith.constant 0 : index
    %17 = vector.load %arg4[%c0_13, %c0_14] : memref<256x128xbf16, #tpu.memory_space<vmem>>, vector<256x128xbf16>
    %cst_15 = arith.constant dense<0.000000e+00> : vector<16x128xf32>
    %18 = tpu.matmul %16, %17, %cst_15 {dimension_numbers = #tpu.dot_dimension_numbers<[1], [0], [0], [1], [0, 0, 1, 1], [], []>} : vector<16x256xbf16>, vector<256x128xbf16>, vector<16x128xf32> -> vector<16x128xf32>
    %19 = vector.broadcast %0 : vector<1x128xf32> to vector<16x128xf32>
    %20 = arith.addf %18, %19 : vector<16x128xf32>
    %cst_16 = arith.constant 0.000000e+00 : f32
    %21 = vector.broadcast %cst_16 : f32 to vector<16x128xf32>
    %22 = arith.maximumf %20, %21 : vector<16x128xf32>
    %23 = arith.truncf %22 : vector<16x128xf32> to vector<16x128xbf16>
    %c0_17 = arith.constant 0 : index
    %c0_18 = arith.constant 0 : index
    %24 = vector.load %arg5[%c0_17, %c0_18] : memref<128x256xbf16, #tpu.memory_space<vmem>>, vector<128x256xbf16>
    %cst_19 = arith.constant dense<0.000000e+00> : vector<16x256xf32>
    %25 = tpu.matmul %23, %24, %cst_19 {dimension_numbers = #tpu.dot_dimension_numbers<[1], [0], [0], [1], [0, 0, 1, 1], [], []>} : vector<16x128xbf16>, vector<128x256xbf16>, vector<16x256xf32> -> vector<16x256xf32>
    %26 = vector.broadcast %1 : vector<1x256xf32> to vector<16x256xf32>
    %27 = arith.addf %25, %26 : vector<16x256xf32>
    %cst_20 = arith.constant 0.000000e+00 : f32
    %28 = vector.broadcast %cst_20 : f32 to vector<16x256xf32>
    %29 = arith.maximumf %27, %28 : vector<16x256xf32>
    %30 = arith.truncf %29 : vector<16x256xf32> to vector<16x256xbf16>
    %c0_21 = arith.constant 0 : index
    %c0_22 = arith.constant 0 : index
    %31 = vector.load %arg7[%c0_21, %c0_22] : memref<256x256xbf16, #tpu.memory_space<vmem>>, vector<256x256xbf16>
    %cst_23 = arith.constant dense<0.000000e+00> : vector<16x256xf32>
    %32 = tpu.matmul %30, %31, %cst_23 {dimension_numbers = #tpu.dot_dimension_numbers<[1], [0], [0], [1], [0, 0, 1, 1], [], []>} : vector<16x256xbf16>, vector<256x256xbf16>, vector<16x256xf32> -> vector<16x256xf32>
    %33 = arith.addf %14, %32 : vector<16x256xf32>
    %34 = vector.broadcast %2 : vector<1x256xf32> to vector<16x256xf32>
    %35 = arith.addf %33, %34 : vector<16x256xf32>
    %cst_24 = arith.constant 0.000000e+00 : f32
    %36 = vector.broadcast %cst_24 : f32 to vector<16x256xf32>
    %37 = arith.maximumf %35, %36 : vector<16x256xf32>
    %38 = arith.truncf %37 : vector<16x256xf32> to vector<16x256xbf16>
    %c0_25 = arith.constant 0 : index
    %c0_26 = arith.constant 0 : index
    %39 = vector.load %arg8[%c0_25, %c0_26] : memref<256x256xbf16, #tpu.memory_space<vmem>>, vector<256x256xbf16>
    %cst_27 = arith.constant dense<0.000000e+00> : vector<16x256xf32>
    %40 = tpu.matmul %38, %39, %cst_27 {dimension_numbers = #tpu.dot_dimension_numbers<[1], [0], [0], [1], [0, 0, 1, 1], [], []>} : vector<16x256xbf16>, vector<256x256xbf16>, vector<16x256xf32> -> vector<16x256xf32>
    %41 = vector.broadcast %3 : vector<1x256xf32> to vector<16x256xf32>
    %42 = arith.addf %40, %41 : vector<16x256xf32>
    %c0_28 = arith.constant 0 : index
    %c0_29 = arith.constant 0 : index
    %43 = vector.load %arg10[%c0_28, %c0_29] : memref<16x256xf32, #tpu.memory_space<vmem>>, vector<16x256xf32>
    tpu.vector_store %arg10[%c0_28, %c0_29], %42 {strides = array<i32>} : memref<16x256xf32, #tpu.memory_space<vmem>>, vector<16x256xf32>,
    return
  }
  func.func @transform_0(%arg0: i32) -> (i32, i32) {
    %c0_i32 = arith.constant 0 : i32
    %c0_i32_0 = arith.constant 0 : i32
    return %arg0, %c0_i32 : i32, i32
  }
  func.func @transform_1(%arg0: i32) -> (i32, i32) {
    %c0_i32 = arith.constant 0 : i32
    %c0_i32_0 = arith.constant 0 : i32
    return %arg0, %c0_i32 : i32, i32
  }
  func.func @transform_2(%arg0: i32) -> (i32, i32) {
    %c0_i32 = arith.constant 0 : i32
    %c0_i32_0 = arith.constant 0 : i32
    %c0_i32_1 = arith.constant 0 : i32
    return %c0_i32, %c0_i32_0 : i32, i32
  }
  func.func @transform_3(%arg0: i32) -> (i32, i32) {
    %c0_i32 = arith.constant 0 : i32
    %c0_i32_0 = arith.constant 0 : i32
    %c0_i32_1 = arith.constant 0 : i32
    return %c0_i32, %c0_i32_0 : i32, i32
  }
  func.func @transform_4(%arg0: i32) -> (i32, i32) {
    %c0_i32 = arith.constant 0 : i32
    %c0_i32_0 = arith.constant 0 : i32
    %c0_i32_1 = arith.constant 0 : i32
    return %c0_i32, %c0_i32_0 : i32, i32
  }
  func.func @transform_5(%arg0: i32) -> (i32, i32) {
    %c0_i32 = arith.constant 0 : i32
    %c0_i32_0 = arith.constant 0 : i32
    %c0_i32_1 = arith.constant 0 : i32
    return %c0_i32, %c0_i32_0 : i32, i32
  }
  func.func @transform_6(%arg0: i32) -> (i32, i32) {
    %c0_i32 = arith.constant 0 : i32
    %c0_i32_0 = arith.constant 0 : i32
    %c0_i32_1 = arith.constant 0 : i32
    return %c0_i32, %c0_i32_0 : i32, i32
  }
  func.func @transform_7(%arg0: i32) -> (i32, i32) {
    %c0_i32 = arith.constant 0 : i32
    %c0_i32_0 = arith.constant 0 : i32
    %c0_i32_1 = arith.constant 0 : i32
    return %c0_i32, %c0_i32_0 : i32, i32
  }
  func.func @transform_8(%arg0: i32) -> (i32, i32) {
    %c0_i32 = arith.constant 0 : i32
    %c0_i32_0 = arith.constant 0 : i32
    %c0_i32_1 = arith.constant 0 : i32
    return %c0_i32, %c0_i32_0 : i32, i32
  }
  func.func @transform_9(%arg0: i32) -> (i32, i32) {
    %c0_i32 = arith.constant 0 : i32
    %c0_i32_0 = arith.constant 0 : i32
    return %arg0, %c0_i32 : i32, i32
  }
}

</mosaic_0001>

<llo_original>
// kernel: tpu_custom_call.1
$region0: #{tpu_custom_call.1}
  #allocation0 [shape = 'u32[]', space=smem, size = 0x4, offset = 0x4, fixed_abs, tag = 'smem constant byte address 0x4 - core index']
  #allocation1 [shape = 'u32[72,128]{1,0:T(1,128)}', space=vmem, size = 0x9000, scoped, tag = 'internal scratch']
  %s0 = inlined_call_operand.vmem [shape: s32[16,1], index: 0, kind: input, shape index: {}]
  %s1 = inlined_call_operand.hbm [shape: f32[16,256], index: 1, kind: input, shape index: {}]
  %s2 = inlined_call_operand.hbm [shape: f32[128,256], index: 2, kind: input, shape index: {}]
  %s3 = inlined_call_operand.hbm [shape: bf16[256,128], index: 3, kind: input, shape index: {}]
  %s4 = inlined_call_operand.hbm [shape: bf16[128,256], index: 4, kind: input, shape index: {}]
  %s5 = inlined_call_operand.hbm [shape: bf16[256,256], index: 5, kind: input, shape index: {}]
  %s6 = inlined_call_operand.hbm [shape: bf16[256,256], index: 6, kind: input, shape index: {}]
  %s7 = inlined_call_operand.hbm [shape: bf16[256,256], index: 7, kind: input, shape index: {}]
  %s8 = inlined_call_operand.vmem [shape: f32[8,256], index: 8, kind: input, shape index: {}]
  %s9 = inlined_call_operand.hbm [shape: f32[16,256], index: 9, kind: output, shape index: {}]
  %s10 = sld [smem:[#allocation0]]
  $region74: #{tpu_custom_call.1} parent=0
    _
  %s12 = ssub.s32 1, %s10
  %s13 = scalar_select 0, %s12, %s10
  $region1: #{tpu_custom_call.1} parent=0
    #allocation2 [shape = 'u8[16384]{0}', space=vmem, size = 0x4000, scoped, tag = 'input window, operand 1, single buffered']
    #allocation3 [shape = 's32[1]{0}', space=sflag, size = 0x4, scoped, tag = 'scoped memory for tpu_custom_call.1']
    #allocation4 [shape = 's32[1]{0}', space=sflag, size = 0x4, scoped, tag = 'scoped memory for tpu_custom_call.1']
    #allocation5 [shape = 'u8[131072]{0}', space=vmem, size = 0x20000, scoped, tag = 'input window, operand 2, single buffered']
    #allocation6 [shape = 's32[1]{0}', space=sflag, size = 0x4, scoped, tag = 'scoped memory for tpu_custom_call.1']
    #allocation7 [shape = 'u8[65536]{0}', space=vmem, size = 0x10000, scoped, tag = 'input window, operand 3, single buffered']
    #allocation8 [shape = 'u8[65536]{0}', space=vmem, size = 0x10000, scoped, tag = 'input window, operand 4, single buffered']
    #allocation9 [shape = 's32[1]{0}', space=sflag, size = 0x4, scoped, tag = 'scoped memory for tpu_custom_call.1']
    #allocation10 [shape = 'u8[131072]{0}', space=vmem, size = 0x20000, scoped, tag = 'input window, operand 5, single buffered']
    #allocation11 [shape = 'u8[131072]{0}', space=vmem, size = 0x20000, scoped, tag = 'input window, operand 6, single buffered']
    #allocation12 [shape = 's32[1]{0}', space=sflag, size = 0x4, scoped, tag = 'scoped memory for tpu_custom_call.1']
    #allocation13 [shape = 'u8[131072]{0}', space=vmem, size = 0x20000, scoped, tag = 'input window, operand 7, single buffered']
    #allocation14 [shape = 'u8[16384]{0}', space=vmem, size = 0x4000, scoped, tag = 'output window, operand 0, single buffered']
    %14 = vsyncpa [#allocation3], 0
    %15 = vsyncpa [#allocation6], 0
    %16 = vsyncpa [#allocation9], 0
    %17 = vsyncpa [#allocation12], 0
    %18 = vsyncpa [#allocation4], 0
    // Predicated region
    $region2: #{tpu_custom_call.1} parent=1 // pred_check
      _
    $region3: #{tpu_custom_call.1} parent=1 // pred_check_branch
      %20 = sbr.rel (0) target = $region5
    $region4: #{tpu_custom_call.1} parent=1 // pred_region
      _
    $region5: #{tpu_custom_call.1} parent=1 // pred_fallthru
      _
    // Predicated region
    $region6: #{tpu_custom_call.1} parent=1 // pred_check
      _
    $region7: #{tpu_custom_call.1} parent=1 // pred_check_branch
      %22 = sbr.rel (0) target = $region9
    $region8: #{tpu_custom_call.1} parent=1 // pred_region
      %24 = vsyncadd [#allocation3], 0
      %s25 = sshll.u32 %s1, 4
      %s26 = int_to_ptr.hbm [resolvable:$true] %s25
      %s27 = sshll.u32 [#allocation2], 4
      %s28 = int_to_ptr.vmem [resolvable:$true] %s27
      %33 = dma.hbm_to_vmem [thread:$0]  %s26, 512, %s28, [#allocation3], 256, 256, 16
    $region9: #{tpu_custom_call.1} parent=1 // pred_fallthru
      _
    // Predicated region
    $region10: #{tpu_custom_call.1} parent=1 // pred_check
      _
    $region11: #{tpu_custom_call.1} parent=1 // pred_check_branch
      %35 = sbr.rel (0) target = $region13
    $region12: #{tpu_custom_call.1} parent=1 // pred_region
      %37 = vsyncadd [#allocation6], 0
      %s38 = sshll.u32 %s2, 4
      %s39 = int_to_ptr.hbm [resolvable:$true] %s38
      %s40 = sshll.u32 [#allocation5], 4
      %s41 = int_to_ptr.vmem [resolvable:$true] %s40
      %46 = dma.hbm_to_vmem [thread:$0]  %s39, 4096, %s41, [#allocation6], 256, 256, 16
    $region13: #{tpu_custom_call.1} parent=1 // pred_fallthru
      _
    // Predicated region
    $region14: #{tpu_custom_call.1} parent=1 // pred_check
      _
    $region15: #{tpu_custom_call.1} parent=1 // pred_check_branch
      %48 = sbr.rel (0) target = $region17
    $region16: #{tpu_custom_call.1} parent=1 // pred_region
      %50 = vsyncadd [#allocation6], 0
      %s51 = sshll.u32 %s3, 4
      %s52 = int_to_ptr.hbm [resolvable:$true] %s51
      %s53 = sshll.u32 [#allocation7], 4
      %s54 = int_to_ptr.vmem [resolvable:$true] %s53
      %59 = dma.hbm_to_vmem [thread:$0]  %s52, 2048, %s54, [#allocation6], 64, 64, 4
    $region17: #{tpu_custom_call.1} parent=1 // pred_fallthru
      _
    // Predicated region
    $region18: #{tpu_custom_call.1} parent=1 // pred_check
      _
    $region19: #{tpu_custom_call.1} parent=1 // pred_check_branch
      %61 = sbr.rel (0) target = $region21
    $region20: #{tpu_custom_call.1} parent=1 // pred_region
      %63 = vsyncadd [#allocation9], 0
      %s64 = sshll.u32 %s4, 4
      %s65 = int_to_ptr.hbm [resolvable:$true] %s64
      %s66 = sshll.u32 [#allocation8], 4
      %s67 = int_to_ptr.vmem [resolvable:$true] %s66
      %72 = dma.hbm_to_vmem [thread:$0]  %s65, 2048, %s67, [#allocation9], 128, 128, 8
    $region21: #{tpu_custom_call.1} parent=1 // pred_fallthru
      _
    // Predicated region
    $region22: #{tpu_custom_call.1} parent=1 // pred_check
      _
    $region23: #{tpu_custom_call.1} parent=1 // pred_check_branch
      %74 = sbr.rel (0) target = $region25
    $region24: #{tpu_custom_call.1} parent=1 // pred_region
      %76 = vsyncadd [#allocation9], 0
      %s77 = sshll.u32 %s5, 4
      %s78 = int_to_ptr.hbm [resolvable:$true] %s77
      %s79 = sshll.u32 [#allocation10], 4
      %s80 = int_to_ptr.vmem [resolvable:$true] %s79
      %85 = dma.hbm_to_vmem [thread:$0]  %s78, 4096, %s80, [#allocation9], 128, 128, 8
    $region25: #{tpu_custom_call.1} parent=1 // pred_fallthru
      _
    // Predicated region
    $region26: #{tpu_custom_call.1} parent=1 // pred_check
      _
    $region27: #{tpu_custom_call.1} parent=1 // pred_check_branch
      %87 = sbr.rel (0) target = $region29
    $region28: #{tpu_custom_call.1} parent=1 // pred_region
      %89 = vsyncadd [#allocation12], 0
      %s90 = sshll.u32 %s6, 4
      %s91 = int_to_ptr.hbm [resolvable:$true] %s90
      %s92 = sshll.u32 [#allocation11], 4
      %s93 = int_to_ptr.vmem [resolvable:$true] %s92
      %98 = dma.hbm_to_vmem [thread:$0]  %s91, 4096, %s93, [#allocation12], 128, 128, 8
    $region29: #{tpu_custom_call.1} parent=1 // pred_fallthru
      _
    // Predicated region
    $region30: #{tpu_custom_call.1} parent=1 // pred_check
      _
    $region31: #{tpu_custom_call.1} parent=1 // pred_check_branch
      %100 = sbr.rel (0) target = $region33
    $region32: #{tpu_custom_call.1} parent=1 // pred_region
      %102 = vsyncadd [#allocation12], 0
      %s103 = sshll.u32 %s7, 4
      %s104 = int_to_ptr.hbm [resolvable:$true] %s103
      %s105 = sshll.u32 [#allocation13], 4
      %s106 = int_to_ptr.vmem [resolvable:$true] %s105
      %111 = dma.hbm_to_vmem [thread:$0]  %s104, 4096, %s106, [#allocation12], 128, 128, 8
    $region33: #{tpu_custom_call.1} parent=1 // pred_fallthru
      _
    // Predicated region
    $region34: #{tpu_custom_call.1} parent=1 // pred_check
      _
    $region35: #{tpu_custom_call.1} parent=1 // pred_check_branch
      %113 = sbr.rel (0) target = $region37
    $region36: #{tpu_custom_call.1} parent=1 // pred_region
      _
    $region37: #{tpu_custom_call.1} parent=1 // pred_fallthru
      _
    // Predicated region
    $region38: #{tpu_custom_call.1} parent=1 // pred_check
      _
    $region39: #{tpu_custom_call.1} parent=1 // pred_check_branch
      %115 = sbr.rel (0) target = $region41
    $region40: #{tpu_custom_call.1} parent=1 // pred_region
      %117 = dma.done [#allocation3], 512
    $region41: #{tpu_custom_call.1} parent=1 // pred_fallthru
      _
    // Predicated region
    $region42: #{tpu_custom_call.1} parent=1 // pred_check
      _
    $region43: #{tpu_custom_call.1} parent=1 // pred_check_branch
      %119 = sbr.rel (0) target = $region45
    $region44: #{tpu_custom_call.1} parent=1 // pred_region
      %121 = dma.done [#allocation6], 4096
    $region45: #{tpu_custom_call.1} parent=1 // pred_fallthru
      _
    // Predicated region
    $region46: #{tpu_custom_call.1} parent=1 // pred_check
      _
    $region47: #{tpu_custom_call.1} parent=1 // pred_check_branch
      %123 = sbr.rel (0) target = $region49
    $region48: #{tpu_custom_call.1} parent=1 // pred_region
      %125 = dma.done [#allocation6], 2048
    $region49: #{tpu_custom_call.1} parent=1 // pred_fallthru
      _
    // Predicated region
    $region50: #{tpu_custom_call.1} parent=1 // pred_check
      _
    $region51: #{tpu_custom_call.1} parent=1 // pred_check_branch
      %127 = sbr.rel (0) target = $region53
    $region52: #{tpu_custom_call.1} parent=1 // pred_region
      %129 = dma.done [#allocation9], 2048
    $region53: #{tpu_custom_call.1} parent=1 // pred_fallthru
      _
    // Predicated region
    $region54: #{tpu_custom_call.1} parent=1 // pred_check
      _
    $region55: #{tpu_custom_call.1} parent=1 // pred_check_branch
      %131 = sbr.rel (0) target = $region57
    $region56: #{tpu_custom_call.1} parent=1 // pred_region
      %133 = dma.done [#allocation9], 4096
    $region57: #{tpu_custom_call.1} parent=1 // pred_fallthru
      _
    // Predicated region
    $region58: #{tpu_custom_call.1} parent=1 // pred_check
      _
    $region59: #{tpu_custom_call.1} parent=1 // pred_check_branch
      %135 = sbr.rel (0) target = $region61
    $region60: #{tpu_custom_call.1} parent=1 // pred_region
      %137 = dma.done [#allocation12], 4096
    $region61: #{tpu_custom_call.1} parent=1 // pred_fallthru
      _
    // Predicated region
    $region62: #{tpu_custom_call.1} parent=1 // pred_check
      _
    $region63: #{tpu_custom_call.1} parent=1 // pred_check_branch
      %139 = sbr.rel (0) target = $region65
    $region64: #{tpu_custom_call.1} parent=1 // pred_region
      %141 = dma.done [#allocation12], 4096
    $region65: #{tpu_custom_call.1} parent=1 // pred_fallthru
      _
    %v142 = vld [vmem:[%s8] ss:$0 sm:$0xff]
    %s143 = scalar_lea.vmem %s8, 1
    %v144 = vld [vmem:[%s143] ss:$8 sm:$0x3]
    %s145 = scalar_lea.vmem %s8, 2
    %v146 = vld [vmem:[%s145] ss:$8 sm:$0x3]
    %s147 = scalar_lea.vmem %s8, 3
    %v148 = vld [vmem:[%s147] ss:$8 sm:$0x3]
    %v149 = vld [vmem:[%s0] sm:$0xff]
    %v150 = vld [vmem:[%s0 + $0x8] sm:$0xff]
    %v151 = vlaneseq
    %v152 = vand.u32 %v151, 127
    %153 = vset.pattern.permute.xlu0 0
    %154 = vperm.xlu0 %153, %v149
    %v155 = vpop.permute.xlu0 %154
    %156 = vset.pattern.permute.xlu0 0
    %157 = vperm.xlu0 %156, %v150
    %v158 = vpop.permute.xlu0 %157
    %vm159 = vcmp.eq.s32.totalorder %v152, %v155
    %vm160 = vcmp.eq.s32.totalorder %v152, %v158
    %v161 = vsel %vm159, 1, 0
    %v162 = vsel %vm160, 1, 0
    %v163 = vcvt.s32.f32 %v161
    %v164 = vcvt.s32.f32 %v162
    %v165 = vld [vmem:[#allocation5] sm:$0xff]
    %v166 = vld [vmem:[#allocation5 + $0x8] sm:$0xff]
    %v167 = vld [vmem:[#allocation5 + $0x10] sm:$0xff]
    %v168 = vld [vmem:[#allocation5 + $0x18] sm:$0xff]
    %v169 = vld [vmem:[#allocation5 + $0x20] sm:$0xff]
    %v170 = vld [vmem:[#allocation5 + $0x28] sm:$0xff]
    %v171 = vld [vmem:[#allocation5 + $0x30] sm:$0xff]
    %v172 = vld [vmem:[#allocation5 + $0x38] sm:$0xff]
    %v173 = vld [vmem:[#allocation5 + $0x40] sm:$0xff]
    %v174 = vld [vmem:[#allocation5 + $0x48] sm:$0xff]
    %v175 = vld [vmem:[#allocation5 + $0x50] sm:$0xff]
    %v176 = vld [vmem:[#allocation5 + $0x58] sm:$0xff]
    %v177 = vld [vmem:[#allocation5 + $0x60] sm:$0xff]
    %v178 = vld [vmem:[#allocation5 + $0x68] sm:$0xff]
    %v179 = vld [vmem:[#allocation5 + $0x70] sm:$0xff]
    %v180 = vld [vmem:[#allocation5 + $0x78] sm:$0xff]
    %v181 = vld [vmem:[#allocation5 + $0x80] sm:$0xff]
    %v182 = vld [vmem:[#allocation5 + $0x88] sm:$0xff]
    %v183 = vld [vmem:[#allocation5 + $0x90] sm:$0xff]
    %v184 = vld [vmem:[#allocation5 + $0x98] sm:$0xff]
    %v185 = vld [vmem:[#allocation5 + $0xa0] sm:$0xff]
    %v186 = vld [vmem:[#allocation5 + $0xa8] sm:$0xff]
    %v187 = vld [vmem:[#allocation5 + $0xb0] sm:$0xff]
    %v188 = vld [vmem:[#allocation5 + $0xb8] sm:$0xff]
    %v189 = vld [vmem:[#allocation5 + $0xc0] sm:$0xff]
    %v190 = vld [vmem:[#allocation5 + $0xc8] sm:$0xff]
    %v191 = vld [vmem:[#allocation5 + $0xd0] sm:$0xff]
    %v192 = vld [vmem:[#allocation5 + $0xd8] sm:$0xff]
    %v193 = vld [vmem:[#allocation5 + $0xe0] sm:$0xff]
    %v194 = vld [vmem:[#allocation5 + $0xe8] sm:$0xff]
    %v195 = vld [vmem:[#allocation5 + $0xf0] sm:$0xff]
    %v196 = vld [vmem:[#allocation5 + $0xf8] sm:$0xff]
    %197 = vmatpush.msra.mxu0 %v195
    %198 = vmatpush.msra.mxu0 %v193
    %199 = vmatpush.msra.mxu0 %v191
    %200 = vmatpush.msra.mxu0 %v189
    %201 = vmatpush.msra.mxu0 %v187
    %202 = vmatpush.msra.mxu0 %v185
    %203 = vmatpush.msra.mxu0 %v183
    %204 = vmatpush.msra.mxu0 %v181
    %205 = vmatpush.msra.mxu0 %v179
    %206 = vmatpush.msra.mxu0 %v177
    %207 = vmatpush.msra.mxu0 %v175
    %208 = vmatpush.msra.mxu0 %v173
    %209 = vmatpush.msra.mxu0 %v171
    %210 = vmatpush.msra.mxu0 %v169
    %211 = vmatpush.msra.mxu0 %v167
    %212 = vmatpush.msra.mxu0 %v165
    %213 = vmatmul.f32.gmra.mxu0 %v163
    %v214 = vpop.f32.mrf.mxu0
    %v215 = vadd.f32 0.0, %v214
    %216 = vmatmul.f32.gmra.mxu0 %v164
    %v217 = vpop.f32.mrf.mxu0
    %v218 = vadd.f32 0.0, %v217
    %219 = vdwg.mxu0
    %220 = vmatpush.msra.mxu0 %v196
    %221 = vmatpush.msra.mxu0 %v194
    %222 = vmatpush.msra.mxu0 %v192
    %223 = vmatpush.msra.mxu0 %v190
    %224 = vmatpush.msra.mxu0 %v188
    %225 = vmatpush.msra.mxu0 %v186
    %226 = vmatpush.msra.mxu0 %v184
    %227 = vmatpush.msra.mxu0 %v182
    %228 = vmatpush.msra.mxu0 %v180
    %229 = vmatpush.msra.mxu0 %v178
    %230 = vmatpush.msra.mxu0 %v176
    %231 = vmatpush.msra.mxu0 %v174
    %232 = vmatpush.msra.mxu0 %v172
    %233 = vmatpush.msra.mxu0 %v170
    %234 = vmatpush.msra.mxu0 %v168
    %235 = vmatpush.msra.mxu0 %v166
    %236 = vmatmul.f32.gmra.mxu0 %v163
    %v237 = vpop.f32.mrf.mxu0
    %v238 = vadd.f32 0.0, %v237
    %239 = vmatmul.f32.gmra.mxu0 %v164
    %v240 = vpop.f32.mrf.mxu0
    %v241 = vadd.f32 0.0, %v240
    %242 = vdwg.mxu0
    %v243 = vpack.c.bf16 %v218, %v215
    %v244 = vpack.c.bf16 %v241, %v238
    %v245 = vld [vmem:[#allocation10] sm:$0xff]
    %v246 = vld [vmem:[#allocation10 + $0x8] sm:$0xff]
    %v247 = vld [vmem:[#allocation10 + $0x10] sm:$0xff]
    %v248 = vld [vmem:[#allocation10 + $0x18] sm:$0xff]
    %v249 = vld [vmem:[#allocation10 + $0x20] sm:$0xff]
    %v250 = vld [vmem:[#allocation10 + $0x28] sm:$0xff]
    %v251 = vld [vmem:[#allocation10 + $0x30] sm:$0xff]
    %v252 = vld [vmem:[#allocation10 + $0x38] sm:$0xff]
    %v253 = vld [vmem:[#allocation10 + $0x40] sm:$0xff]
    %v254 = vld [vmem:[#allocation10 + $0x48] sm:$0xff]
    %v255 = vld [vmem:[#allocation10 + $0x50] sm:$0xff]
    %v256 = vld [vmem:[#allocation10 + $0x58] sm:$0xff]
    %v257 = vld [vmem:[#allocation10 + $0x60] sm:$0xff]
    %v258 = vld [vmem:[#allocation10 + $0x68] sm:$0xff]
    %v259 = vld [vmem:[#allocation10 + $0x70] sm:$0xff]
    %v260 = vld [vmem:[#allocation10 + $0x78] sm:$0xff]
    %v261 = vld [vmem:[#allocation10 + $0x80] sm:$0xff]
    %v262 = vld [vmem:[#allocation10 + $0x88] sm:$0xff]
    %v263 = vld [vmem:[#allocation10 + $0x90] sm:$0xff]
    %v264 = vld [vmem:[#allocation10 + $0x98] sm:$0xff]
    %v265 = vld [vmem:[#allocation10 + $0xa0] sm:$0xff]
    %v266 = vld [vmem:[#allocation10 + $0xa8] sm:$0xff]
    %v267 = vld [vmem:[#allocation10 + $0xb0] sm:$0xff]
    %v268 = vld [vmem:[#allocation10 + $0xb8] sm:$0xff]
    %v269 = vld [vmem:[#allocation10 + $0xc0] sm:$0xff]
    %v270 = vld [vmem:[#allocation10 + $0xc8] sm:$0xff]
    %v271 = vld [vmem:[#allocation10 + $0xd0] sm:$0xff]
    %v272 = vld [vmem:[#allocation10 + $0xd8] sm:$0xff]
    %v273 = vld [vmem:[#allocation10 + $0xe0] sm:$0xff]
    %v274 = vld [vmem:[#allocation10 + $0xe8] sm:$0xff]
    %v275 = vld [vmem:[#allocation10 + $0xf0] sm:$0xff]
    %v276 = vld [vmem:[#allocation10 + $0xf8] sm:$0xff]
    %v277 = vld [vmem:[#allocation2] sm:$0xff]
    %v278 = vld [vmem:[#allocation2 + $0x8] sm:$0xff]
    %v279 = vld [vmem:[#allocation2 + $0x10] sm:$0xff]
    %v280 = vld [vmem:[#allocation2 + $0x18] sm:$0xff]
    %v281 = vpack.c.bf16 %v279, %v277
    %v282 = vpack.c.bf16 %v280, %v278
    %v283 = vld [vmem:[#allocation7] sm:$0xf]
    %v284 = vld [vmem:[#allocation7 + $0x4] sm:$0xf]
    %v285 = vld [vmem:[#allocation7 + $0x8] sm:$0xf]
    %v286 = vld [vmem:[#allocation7 + $0xc] sm:$0xf]
    %v287 = vld [vmem:[#allocation7 + $0x10] sm:$0xf]
    %v288 = vld [vmem:[#allocation7 + $0x14] sm:$0xf]
    %v289 = vld [vmem:[#allocation7 + $0x18] sm:$0xf]
    %v290 = vld [vmem:[#allocation7 + $0x1c] sm:$0xf]
    %v291 = vld [vmem:[#allocation7 + $0x20] sm:$0xf]
    %v292 = vld [vmem:[#allocation7 + $0x24] sm:$0xf]
    %v293 = vld [vmem:[#allocation7 + $0x28] sm:$0xf]
    %v294 = vld [vmem:[#allocation7 + $0x2c] sm:$0xf]
    %v295 = vld [vmem:[#allocation7 + $0x30] sm:$0xf]
    %v296 = vld [vmem:[#allocation7 + $0x34] sm:$0xf]
    %v297 = vld [vmem:[#allocation7 + $0x38] sm:$0xf]
    %v298 = vld [vmem:[#allocation7 + $0x3c] sm:$0xf]
    %v299 = vld [vmem:[#allocation7 + $0x40] sm:$0xf]
    %v300 = vld [vmem:[#allocation7 + $0x44] sm:$0xf]
    %v301 = vld [vmem:[#allocation7 + $0x48] sm:$0xf]
    %v302 = vld [vmem:[#allocation7 + $0x4c] sm:$0xf]
    %v303 = vld [vmem:[#allocation7 + $0x50] sm:$0xf]
    %v304 = vld [vmem:[#allocation7 + $0x54] sm:$0xf]
    %v305 = vld [vmem:[#allocation7 + $0x58] sm:$0xf]
    %v306 = vld [vmem:[#allocation7 + $0x5c] sm:$0xf]
    %v307 = vld [vmem:[#allocation7 + $0x60] sm:$0xf]
    %v308 = vld [vmem:[#allocation7 + $0x64] sm:$0xf]
    %v309 = vld [vmem:[#allocation7 + $0x68] sm:$0xf]
    %v310 = vld [vmem:[#allocation7 + $0x6c] sm:$0xf]
    %v311 = vld [vmem:[#allocation7 + $0x70] sm:$0xf]
    %v312 = vld [vmem:[#allocation7 + $0x74] sm:$0xf]
    %v313 = vld [vmem:[#allocation7 + $0x78] sm:$0xf]
    %v314 = vld [vmem:[#allocation7 + $0x7c] sm:$0xf]
    %v347 = vunpack.c.l.b16 %v283
    %v348 = vunpack.c.l.b16 %v284
    %v349 = vunpack.c.l.b16 %v285
    %v350 = vunpack.c.l.b16 %v286
    %v351 = vunpack.c.l.b16 %v287
    %v352 = vunpack.c.l.b16 %v288
    %v353 = vunpack.c.l.b16 %v289
    %v354 = vunpack.c.l.b16 %v290
    %v355 = vunpack.c.l.b16 %v291
    %v356 = vunpack.c.l.b16 %v292
    %v357 = vunpack.c.l.b16 %v293
    %v358 = vunpack.c.l.b16 %v294
    %v359 = vunpack.c.l.b16 %v295
    %v360 = vunpack.c.l.b16 %v296
    %v361 = vunpack.c.l.b16 %v297
    %v362 = vunpack.c.l.b16 %v298
    %v363 = vunpack.c.l.b16 %v299
    %v364 = vunpack.c.l.b16 %v300
    %v365 = vunpack.c.l.b16 %v301
    %v366 = vunpack.c.l.b16 %v302
    %v367 = vunpack.c.l.b16 %v303
    %v368 = vunpack.c.l.b16 %v304
    %v369 = vunpack.c.l.b16 %v305
    %v370 = vunpack.c.l.b16 %v306
    %v371 = vunpack.c.l.b16 %v307
    %v372 = vunpack.c.l.b16 %v308
    %v373 = vunpack.c.l.b16 %v309
    %v374 = vunpack.c.l.b16 %v310
    %v375 = vunpack.c.l.b16 %v311
    %v376 = vunpack.c.l.b16 %v312
    %v377 = vunpack.c.l.b16 %v313
    %v378 = vunpack.c.l.b16 %v314
    %v379 = vpack.c.b16 %v348, %v347
    %v380 = vpack.c.b16 %v350, %v349
    %v381 = vpack.c.b16 %v352, %v351
    %v382 = vpack.c.b16 %v354, %v353
    %v383 = vpack.c.b16 %v356, %v355
    %v384 = vpack.c.b16 %v358, %v357
    %v385 = vpack.c.b16 %v360, %v359
    %v386 = vpack.c.b16 %v362, %v361
    %v387 = vpack.c.b16 %v364, %v363
    %v388 = vpack.c.b16 %v366, %v365
    %v389 = vpack.c.b16 %v368, %v367
    %v390 = vpack.c.b16 %v370, %v369
    %v391 = vpack.c.b16 %v372, %v371
    %v392 = vpack.c.b16 %v374, %v373
    %v393 = vpack.c.b16 %v376, %v375
    %v394 = vpack.c.b16 %v378, %v377
    %411 = vmatpush.bf16.msra.mxu0 %v386
    %412 = vmatpush.bf16.msra.mxu0 %v385
    %413 = vmatpush.bf16.msra.mxu0 %v384
    %414 = vmatpush.bf16.msra.mxu0 %v383
    %415 = vmatpush.bf16.msra.mxu0 %v382
    %416 = vmatpush.bf16.msra.mxu0 %v381
    %417 = vmatpush.bf16.msra.mxu0 %v380
    %418 = vmatpush.bf16.msra.mxu0 %v379
    %419 = vmatmul.bf16.gmra.mxu0 %v281
    %v420 = vpop.f32.mrf.mxu0
    %v421 = vadd.f32 %v142, %v420
    %v422 = vpop.f32.mrf.mxu0
    %v423 = vadd.f32 %v142, %v422
    %424 = vdwg.mxu0
    %425 = vmatpush.bf16.msra.mxu0 %v394
    %426 = vmatpush.bf16.msra.mxu0 %v393
    %427 = vmatpush.bf16.msra.mxu0 %v392
    %428 = vmatpush.bf16.msra.mxu0 %v391
    %429 = vmatpush.bf16.msra.mxu0 %v390
    %430 = vmatpush.bf16.msra.mxu0 %v389
    %431 = vmatpush.bf16.msra.mxu0 %v388
    %432 = vmatpush.bf16.msra.mxu0 %v387
    %433 = vmatmul.bf16.gmra.mxu0 %v282
    %v434 = vpop.f32.mrf.mxu0
    %v435 = vadd.f32 %v421, %v434
    %v436 = vpop.f32.mrf.mxu0
    %v437 = vadd.f32 %v423, %v436
    %438 = vdwg.mxu0
    %v439 = vmax.f32 %v435, 0.0
    %v440 = vmax.f32 %v437, 0.0
    %v441 = vpack.c.bf16 %v440, %v439
    %v442 = vld [vmem:[#allocation8] sm:$0xff]
    %v443 = vld [vmem:[#allocation8 + $0x8] sm:$0xff]
    %v444 = vld [vmem:[#allocation8 + $0x10] sm:$0xff]
    %v445 = vld [vmem:[#allocation8 + $0x18] sm:$0xff]
    %v446 = vld [vmem:[#allocation8 + $0x20] sm:$0xff]
    %v447 = vld [vmem:[#allocation8 + $0x28] sm:$0xff]
    %v448 = vld [vmem:[#allocation8 + $0x30] sm:$0xff]
    %v449 = vld [vmem:[#allocation8 + $0x38] sm:$0xff]
    %v450 = vld [vmem:[#allocation8 + $0x40] sm:$0xff]
    %v451 = vld [vmem:[#allocation8 + $0x48] sm:$0xff]
    %v452 = vld [vmem:[#allocation8 + $0x50] sm:$0xff]
    %v453 = vld [vmem:[#allocation8 + $0x58] sm:$0xff]
    %v454 = vld [vmem:[#allocation8 + $0x60] sm:$0xff]
    %v455 = vld [vmem:[#allocation8 + $0x68] sm:$0xff]
    %v456 = vld [vmem:[#allocation8 + $0x70] sm:$0xff]
    %v457 = vld [vmem:[#allocation8 + $0x78] sm:$0xff]
    %v459 = vperm.slane %v144, 0
    %v460 = vperm.slane %v144, 1
    %v479 = vunpack.c.l.b16 %v442
    %v480 = vunpack.c.h.b16 %v442
    %v481 = vunpack.c.l.b16 %v443
    %v482 = vunpack.c.h.b16 %v443
    %v483 = vunpack.c.l.b16 %v444
    %v484 = vunpack.c.h.b16 %v444
    %v485 = vunpack.c.l.b16 %v445
    %v486 = vunpack.c.h.b16 %v445
    %v487 = vunpack.c.l.b16 %v446
    %v488 = vunpack.c.h.b16 %v446
    %v489 = vunpack.c.l.b16 %v447
    %v490 = vunpack.c.h.b16 %v447
    %v491 = vunpack.c.l.b16 %v448
    %v492 = vunpack.c.h.b16 %v448
    %v493 = vunpack.c.l.b16 %v449
    %v494 = vunpack.c.h.b16 %v449
    %v495 = vunpack.c.l.b16 %v450
    %v496 = vunpack.c.h.b16 %v450
    %v497 = vunpack.c.l.b16 %v451
    %v498 = vunpack.c.h.b16 %v451
    %v499 = vunpack.c.l.b16 %v452
    %v500 = vunpack.c.h.b16 %v452
    %v501 = vunpack.c.l.b16 %v453
    %v502 = vunpack.c.h.b16 %v453
    %v503 = vunpack.c.l.b16 %v454
    %v504 = vunpack.c.h.b16 %v454
    %v505 = vunpack.c.l.b16 %v455
    %v506 = vunpack.c.h.b16 %v455
    %v507 = vunpack.c.l.b16 %v456
    %v508 = vunpack.c.h.b16 %v456
    %v509 = vunpack.c.l.b16 %v457
    %v510 = vunpack.c.h.b16 %v457
    %v511 = vpack.c.b16 %v481, %v479
    %v512 = vpack.c.b16 %v482, %v480
    %v513 = vpack.c.b16 %v485, %v483
    %v514 = vpack.c.b16 %v486, %v484
    %v515 = vpack.c.b16 %v489, %v487
    %v516 = vpack.c.b16 %v490, %v488
    %v517 = vpack.c.b16 %v493, %v491
    %v518 = vpack.c.b16 %v494, %v492
    %v519 = vpack.c.b16 %v497, %v495
    %v520 = vpack.c.b16 %v498, %v496
    %v521 = vpack.c.b16 %v501, %v499
    %v522 = vpack.c.b16 %v502, %v500
    %v523 = vpack.c.b16 %v505, %v503
    %v524 = vpack.c.b16 %v506, %v504
    %v525 = vpack.c.b16 %v509, %v507
    %v526 = vpack.c.b16 %v510, %v508
    %543 = vmatpush.bf16.msra.mxu0 %v525
    %544 = vmatpush.bf16.msra.mxu0 %v523
    %545 = vmatpush.bf16.msra.mxu0 %v521
    %546 = vmatpush.bf16.msra.mxu0 %v519
    %547 = vmatpush.bf16.msra.mxu0 %v517
    %548 = vmatpush.bf16.msra.mxu0 %v515
    %549 = vmatpush.bf16.msra.mxu0 %v513
    %550 = vmatpush.bf16.msra.mxu0 %v511
    %551 = vmatmul.bf16.gmra.mxu0 %v441
    %v552 = vpop.f32.mrf.mxu0
    %v553 = vadd.f32 %v459, %v552
    %v554 = vpop.f32.mrf.mxu0
    %v555 = vadd.f32 %v459, %v554
    %556 = vdwg.mxu0
    %557 = vmatpush.bf16.msra.mxu0 %v526
    %558 = vmatpush.bf16.msra.mxu0 %v524
    %559 = vmatpush.bf16.msra.mxu0 %v522
    %560 = vmatpush.bf16.msra.mxu0 %v520
    %561 = vmatpush.bf16.msra.mxu0 %v518
    %562 = vmatpush.bf16.msra.mxu0 %v516
    %563 = vmatpush.bf16.msra.mxu0 %v514
    %564 = vmatpush.bf16.msra.mxu0 %v512
    %565 = vmatmul.bf16.gmra.mxu0 %v441
    %v566 = vpop.f32.mrf.mxu0
    %v567 = vadd.f32 %v460, %v566
    %v568 = vpop.f32.mrf.mxu0
    %v569 = vadd.f32 %v460, %v568
    %570 = vdwg.mxu0
    %v571 = vmax.f32 %v553, 0.0
    %v572 = vmax.f32 %v567, 0.0
    %v573 = vmax.f32 %v555, 0.0
    %v574 = vmax.f32 %v569, 0.0
    %v575 = vpack.c.bf16 %v573, %v571
    %v576 = vpack.c.bf16 %v574, %v572
    %v577 = vld [vmem:[#allocation11] sm:$0xff]
    %v578 = vld [vmem:[#allocation11 + $0x8] sm:$0xff]
    %v579 = vld [vmem:[#allocation11 + $0x10] sm:$0xff]
    %v580 = vld [vmem:[#allocation11 + $0x18] sm:$0xff]
    %v581 = vld [vmem:[#allocation11 + $0x20] sm:$0xff]
    %v582 = vld [vmem:[#allocation11 + $0x28] sm:$0xff]
    %v583 = vld [vmem:[#allocation11 + $0x30] sm:$0xff]
    %v584 = vld [vmem:[#allocation11 + $0x38] sm:$0xff]
    %v585 = vld [vmem:[#allocation11 + $0x40] sm:$0xff]
    %v586 = vld [vmem:[#allocation11 + $0x48] sm:$0xff]
    %v587 = vld [vmem:[#allocation11 + $0x50] sm:$0xff]
    %v588 = vld [vmem:[#allocation11 + $0x58] sm:$0xff]
    %v589 = vld [vmem:[#allocation11 + $0x60] sm:$0xff]
    %v590 = vld [vmem:[#allocation11 + $0x68] sm:$0xff]
    %v591 = vld [vmem:[#allocation11 + $0x70] sm:$0xff]
    %v592 = vld [vmem:[#allocation11 + $0x78] sm:$0xff]
    %v593 = vld [vmem:[#allocation11 + $0x80] sm:$0xff]
    %v594 = vld [vmem:[#allocation11 + $0x88] sm:$0xff]
    %v595 = vld [vmem:[#allocation11 + $0x90] sm:$0xff]
    %v596 = vld [vmem:[#allocation11 + $0x98] sm:$0xff]
    %v597 = vld [vmem:[#allocation11 + $0xa0] sm:$0xff]
    %v598 = vld [vmem:[#allocation11 + $0xa8] sm:$0xff]
    %v599 = vld [vmem:[#allocation11 + $0xb0] sm:$0xff]
    %v600 = vld [vmem:[#allocation11 + $0xb8] sm:$0xff]
    %v601 = vld [vmem:[#allocation11 + $0xc0] sm:$0xff]
    %v602 = vld [vmem:[#allocation11 + $0xc8] sm:$0xff]
    %v603 = vld [vmem:[#allocation11 + $0xd0] sm:$0xff]
    %v604 = vld [vmem:[#allocation11 + $0xd8] sm:$0xff]
    %v605 = vld [vmem:[#allocation11 + $0xe0] sm:$0xff]
    %v606 = vld [vmem:[#allocation11 + $0xe8] sm:$0xff]
    %v607 = vld [vmem:[#allocation11 + $0xf0] sm:$0xff]
    %v608 = vld [vmem:[#allocation11 + $0xf8] sm:$0xff]
    %v641 = vunpack.c.l.b16 %v577
    %v642 = vunpack.c.h.b16 %v577
    %v643 = vunpack.c.l.b16 %v578
    %v644 = vunpack.c.h.b16 %v578
    %v645 = vunpack.c.l.b16 %v579
    %v646 = vunpack.c.h.b16 %v579
    %v647 = vunpack.c.l.b16 %v580
    %v648 = vunpack.c.h.b16 %v580
    %v649 = vunpack.c.l.b16 %v581
    %v650 = vunpack.c.h.b16 %v581
    %v651 = vunpack.c.l.b16 %v582
    %v652 = vunpack.c.h.b16 %v582
    %v653 = vunpack.c.l.b16 %v583
    %v654 = vunpack.c.h.b16 %v583
    %v655 = vunpack.c.l.b16 %v584
    %v656 = vunpack.c.h.b16 %v584
    %v657 = vunpack.c.l.b16 %v585
    %v658 = vunpack.c.h.b16 %v585
    %v659 = vunpack.c.l.b16 %v586
    %v660 = vunpack.c.h.b16 %v586
    %v661 = vunpack.c.l.b16 %v587
    %v662 = vunpack.c.h.b16 %v587
    %v663 = vunpack.c.l.b16 %v588
    %v664 = vunpack.c.h.b16 %v588
    %v665 = vunpack.c.l.b16 %v589
    %v666 = vunpack.c.h.b16 %v589
    %v667 = vunpack.c.l.b16 %v590
    %v668 = vunpack.c.h.b16 %v590
    %v669 = vunpack.c.l.b16 %v591
    %v670 = vunpack.c.h.b16 %v591
    %v671 = vunpack.c.l.b16 %v592
    %v672 = vunpack.c.h.b16 %v592
    %v673 = vunpack.c.l.b16 %v593
    %v674 = vunpack.c.h.b16 %v593
    %v675 = vunpack.c.l.b16 %v594
    %v676 = vunpack.c.h.b16 %v594
    %v677 = vunpack.c.l.b16 %v595
    %v678 = vunpack.c.h.b16 %v595
    %v679 = vunpack.c.l.b16 %v596
    %v680 = vunpack.c.h.b16 %v596
    %v681 = vunpack.c.l.b16 %v597
    %v682 = vunpack.c.h.b16 %v597
    %v683 = vunpack.c.l.b16 %v598
    %v684 = vunpack.c.h.b16 %v598
    %v685 = vunpack.c.l.b16 %v599
    %v686 = vunpack.c.h.b16 %v599
    %v687 = vunpack.c.l.b16 %v600
    %v688 = vunpack.c.h.b16 %v600
    %v689 = vunpack.c.l.b16 %v601
    %v690 = vunpack.c.h.b16 %v601
    %v691 = vunpack.c.l.b16 %v602
    %v692 = vunpack.c.h.b16 %v602
    %v693 = vunpack.c.l.b16 %v603
    %v694 = vunpack.c.h.b16 %v603
    %v695 = vunpack.c.l.b16 %v604
    %v696 = vunpack.c.h.b16 %v604
    %v697 = vunpack.c.l.b16 %v605
    %v698 = vunpack.c.h.b16 %v605
    %v699 = vunpack.c.l.b16 %v606
    %v700 = vunpack.c.h.b16 %v606
    %v701 = vunpack.c.l.b16 %v607
    %v702 = vunpack.c.h.b16 %v607
    %v703 = vunpack.c.l.b16 %v608
    %v704 = vunpack.c.h.b16 %v608
    %v705 = vpack.c.b16 %v643, %v641
    %v706 = vpack.c.b16 %v644, %v642
    %v707 = vpack.c.b16 %v647, %v645
    %v708 = vpack.c.b16 %v648, %v646
    %v709 = vpack.c.b16 %v651, %v649
    %v710 = vpack.c.b16 %v652, %v650
    %v711 = vpack.c.b16 %v655, %v653
    %v712 = vpack.c.b16 %v656, %v654
    %v713 = vpack.c.b16 %v659, %v657
    %v714 = vpack.c.b16 %v660, %v658
    %v715 = vpack.c.b16 %v663, %v661
    %v716 = vpack.c.b16 %v664, %v662
    %v717 = vpack.c.b16 %v667, %v665
    %v718 = vpack.c.b16 %v668, %v666
    %v719 = vpack.c.b16 %v671, %v669
    %v720 = vpack.c.b16 %v672, %v670
    %v721 = vpack.c.b16 %v675, %v673
    %v722 = vpack.c.b16 %v676, %v674
    %v723 = vpack.c.b16 %v679, %v677
    %v724 = vpack.c.b16 %v680, %v678
    %v725 = vpack.c.b16 %v683, %v681
    %v726 = vpack.c.b16 %v684, %v682
    %v727 = vpack.c.b16 %v687, %v685
    %v728 = vpack.c.b16 %v688, %v686
    %v729 = vpack.c.b16 %v691, %v689
    %v730 = vpack.c.b16 %v692, %v690
    %v731 = vpack.c.b16 %v695, %v693
    %v732 = vpack.c.b16 %v696, %v694
    %v733 = vpack.c.b16 %v699, %v697
    %v734 = vpack.c.b16 %v700, %v698
    %v735 = vpack.c.b16 %v703, %v701
    %v736 = vpack.c.b16 %v704, %v702
    %769 = vmatpush.bf16.msra.mxu0 %v719
    %770 = vmatpush.bf16.msra.mxu0 %v717
    %771 = vmatpush.bf16.msra.mxu0 %v715
    %772 = vmatpush.bf16.msra.mxu0 %v713
    %773 = vmatpush.bf16.msra.mxu0 %v711
    %774 = vmatpush.bf16.msra.mxu0 %v709
    %775 = vmatpush.bf16.msra.mxu0 %v707
    %776 = vmatpush.bf16.msra.mxu0 %v705
    %777 = vmatmul.bf16.gmra.mxu0 %v575
    %v778 = vpop.f32.mrf.mxu0
    %v779 = vadd.f32 0.0, %v778
    %v780 = vpop.f32.mrf.mxu0
    %v781 = vadd.f32 0.0, %v780
    %782 = vdwg.mxu0
    %783 = vmatpush.bf16.msra.mxu0 %v735
    %784 = vmatpush.bf16.msra.mxu0 %v733
    %785 = vmatpush.bf16.msra.mxu0 %v731
    %786 = vmatpush.bf16.msra.mxu0 %v729
    %787 = vmatpush.bf16.msra.mxu0 %v727
    %788 = vmatpush.bf16.msra.mxu0 %v725
    %789 = vmatpush.bf16.msra.mxu0 %v723
    %790 = vmatpush.bf16.msra.mxu0 %v721
    %791 = vmatmul.bf16.gmra.mxu0 %v576
    %v792 = vpop.f32.mrf.mxu0
    %v793 = vadd.f32 %v779, %v792
    %v794 = vpop.f32.mrf.mxu0
    %v795 = vadd.f32 %v781, %v794
    %796 = vdwg.mxu0
    %797 = vmatpush.bf16.msra.mxu0 %v720
    %798 = vmatpush.bf16.msra.mxu0 %v718
    %799 = vmatpush.bf16.msra.mxu0 %v716
    %800 = vmatpush.bf16.msra.mxu0 %v714
    %801 = vmatpush.bf16.msra.mxu0 %v712
    %802 = vmatpush.bf16.msra.mxu0 %v710
    %803 = vmatpush.bf16.msra.mxu0 %v708
    %804 = vmatpush.bf16.msra.mxu0 %v706
    %805 = vmatmul.bf16.gmra.mxu0 %v575
    %v806 = vpop.f32.mrf.mxu0
    %v807 = vadd.f32 0.0, %v806
    %v808 = vpop.f32.mrf.mxu0
    %v809 = vadd.f32 0.0, %v808
    %810 = vdwg.mxu0
    %811 = vmatpush.bf16.msra.mxu0 %v736
    %812 = vmatpush.bf16.msra.mxu0 %v734
    %813 = vmatpush.bf16.msra.mxu0 %v732
    %814 = vmatpush.bf16.msra.mxu0 %v730
    %815 = vmatpush.bf16.msra.mxu0 %v728
    %816 = vmatpush.bf16.msra.mxu0 %v726
    %817 = vmatpush.bf16.msra.mxu0 %v724
    %818 = vmatpush.bf16.msra.mxu0 %v722
    %819 = vmatmul.bf16.gmra.mxu0 %v576
    %v820 = vpop.f32.mrf.mxu0
    %v821 = vadd.f32 %v807, %v820
    %v822 = vpop.f32.mrf.mxu0
    %v823 = vadd.f32 %v809, %v822
    %824 = vdwg.mxu0
    %v857 = vunpack.c.l.b16 %v245
    %v858 = vunpack.c.h.b16 %v245
    %v859 = vunpack.c.l.b16 %v246
    %v860 = vunpack.c.h.b16 %v246
    %v861 = vunpack.c.l.b16 %v247
    %v862 = vunpack.c.h.b16 %v247
    %v863 = vunpack.c.l.b16 %v248
    %v864 = vunpack.c.h.b16 %v248
    %v865 = vunpack.c.l.b16 %v249
    %v866 = vunpack.c.h.b16 %v249
    %v867 = vunpack.c.l.b16 %v250
    %v868 = vunpack.c.h.b16 %v250
    %v869 = vunpack.c.l.b16 %v251
    %v870 = vunpack.c.h.b16 %v251
    %v871 = vunpack.c.l.b16 %v252
    %v872 = vunpack.c.h.b16 %v252
    %v873 = vunpack.c.l.b16 %v253
    %v874 = vunpack.c.h.b16 %v253
    %v875 = vunpack.c.l.b16 %v254
    %v876 = vunpack.c.h.b16 %v254
    %v877 = vunpack.c.l.b16 %v255
    %v878 = vunpack.c.h.b16 %v255
    %v879 = vunpack.c.l.b16 %v256
    %v880 = vunpack.c.h.b16 %v256
    %v881 = vunpack.c.l.b16 %v257
    %v882 = vunpack.c.h.b16 %v257
    %v883 = vunpack.c.l.b16 %v258
    %v884 = vunpack.c.h.b16 %v258
    %v885 = vunpack.c.l.b16 %v259
    %v886 = vunpack.c.h.b16 %v259
    %v887 = vunpack.c.l.b16 %v260
    %v888 = vunpack.c.h.b16 %v260
    %v889 = vunpack.c.l.b16 %v261
    %v890 = vunpack.c.h.b16 %v261
    %v891 = vunpack.c.l.b16 %v262
    %v892 = vunpack.c.h.b16 %v262
    %v893 = vunpack.c.l.b16 %v263
    %v894 = vunpack.c.h.b16 %v263
    %v895 = vunpack.c.l.b16 %v264
    %v896 = vunpack.c.h.b16 %v264
    %v897 = vunpack.c.l.b16 %v265
    %v898 = vunpack.c.h.b16 %v265
    %v899 = vunpack.c.l.b16 %v266
    %v900 = vunpack.c.h.b16 %v266
    %v901 = vunpack.c.l.b16 %v267
    %v902 = vunpack.c.h.b16 %v267
    %v903 = vunpack.c.l.b16 %v268
    %v904 = vunpack.c.h.b16 %v268
    %v905 = vunpack.c.l.b16 %v269
    %v906 = vunpack.c.h.b16 %v269
    %v907 = vunpack.c.l.b16 %v270
    %v908 = vunpack.c.h.b16 %v270
    %v909 = vunpack.c.l.b16 %v271
    %v910 = vunpack.c.h.b16 %v271
    %v911 = vunpack.c.l.b16 %v272
    %v912 = vunpack.c.h.b16 %v272
    %v913 = vunpack.c.l.b16 %v273
    %v914 = vunpack.c.h.b16 %v273
    %v915 = vunpack.c.l.b16 %v274
    %v916 = vunpack.c.h.b16 %v274
    %v917 = vunpack.c.l.b16 %v275
    %v918 = vunpack.c.h.b16 %v275
    %v919 = vunpack.c.l.b16 %v276
    %v920 = vunpack.c.h.b16 %v276
    %v921 = vpack.c.b16 %v859, %v857
    %v922 = vpack.c.b16 %v860, %v858
    %v923 = vpack.c.b16 %v863, %v861
    %v924 = vpack.c.b16 %v864, %v862
    %v925 = vpack.c.b16 %v867, %v865
    %v926 = vpack.c.b16 %v868, %v866
    %v927 = vpack.c.b16 %v871, %v869
    %v928 = vpack.c.b16 %v872, %v870
    %v929 = vpack.c.b16 %v875, %v873
    %v930 = vpack.c.b16 %v876, %v874
    %v931 = vpack.c.b16 %v879, %v877
    %v932 = vpack.c.b16 %v880, %v878
    %v933 = vpack.c.b16 %v883, %v881
    %v934 = vpack.c.b16 %v884, %v882
    %v935 = vpack.c.b16 %v887, %v885
    %v936 = vpack.c.b16 %v888, %v886
    %v937 = vpack.c.b16 %v891, %v889
    %v938 = vpack.c.b16 %v892, %v890
    %v939 = vpack.c.b16 %v895, %v893
    %v940 = vpack.c.b16 %v896, %v894
    %v941 = vpack.c.b16 %v899, %v897
    %v942 = vpack.c.b16 %v900, %v898
    %v943 = vpack.c.b16 %v903, %v901
    %v944 = vpack.c.b16 %v904, %v902
    %v945 = vpack.c.b16 %v907, %v905
    %v946 = vpack.c.b16 %v908, %v906
    %v947 = vpack.c.b16 %v911, %v909
    %v948 = vpack.c.b16 %v912, %v910
    %v949 = vpack.c.b16 %v915, %v913
    %v950 = vpack.c.b16 %v916, %v914
    %v951 = vpack.c.b16 %v919, %v917
    %v952 = vpack.c.b16 %v920, %v918
    %985 = vmatpush.bf16.msra.mxu0 %v935
    %986 = vmatpush.bf16.msra.mxu0 %v933
    %987 = vmatpush.bf16.msra.mxu0 %v931
    %988 = vmatpush.bf16.msra.mxu0 %v929
    %989 = vmatpush.bf16.msra.mxu0 %v927
    %990 = vmatpush.bf16.msra.mxu0 %v925
    %991 = vmatpush.bf16.msra.mxu0 %v923
    %992 = vmatpush.bf16.msra.mxu0 %v921
    %993 = vmatmul.bf16.gmra.mxu0 %v243
    %v994 = vpop.f32.mrf.mxu0
    %v995 = vadd.f32 %v793, %v994
    %v996 = vpop.f32.mrf.mxu0
    %v997 = vadd.f32 %v795, %v996
    %998 = vdwg.mxu0
    %999 = vmatpush.bf16.msra.mxu0 %v951
    %1000 = vmatpush.bf16.msra.mxu0 %v949
    %1001 = vmatpush.bf16.msra.mxu0 %v947
    %1002 = vmatpush.bf16.msra.mxu0 %v945
    %1003 = vmatpush.bf16.msra.mxu0 %v943
    %1004 = vmatpush.bf16.msra.mxu0 %v941
    %1005 = vmatpush.bf16.msra.mxu0 %v939
    %1006 = vmatpush.bf16.msra.mxu0 %v937
    %1007 = vmatmul.bf16.gmra.mxu0 %v244
    %v1008 = vpop.f32.mrf.mxu0
    %v1009 = vadd.f32 %v995, %v1008
    %v1010 = vpop.f32.mrf.mxu0
    %v1011 = vadd.f32 %v997, %v1010
    %1012 = vdwg.mxu0
    %1013 = vmatpush.bf16.msra.mxu0 %v936
    %1014 = vmatpush.bf16.msra.mxu0 %v934
    %1015 = vmatpush.bf16.msra.mxu0 %v932
    %1016 = vmatpush.bf16.msra.mxu0 %v930
    %1017 = vmatpush.bf16.msra.mxu0 %v928
    %1018 = vmatpush.bf16.msra.mxu0 %v926
    %1019 = vmatpush.bf16.msra.mxu0 %v924
    %1020 = vmatpush.bf16.msra.mxu0 %v922
    %1021 = vmatmul.bf16.gmra.mxu0 %v243
    %v1022 = vpop.f32.mrf.mxu0
    %v1023 = vadd.f32 %v821, %v1022
    %v1024 = vpop.f32.mrf.mxu0
    %v1025 = vadd.f32 %v823, %v1024
    %1026 = vdwg.mxu0
    %1027 = vmatpush.bf16.msra.mxu0 %v952
    %1028 = vmatpush.bf16.msra.mxu0 %v950
    %1029 = vmatpush.bf16.msra.mxu0 %v948
    %1030 = vmatpush.bf16.msra.mxu0 %v946
    %1031 = vmatpush.bf16.msra.mxu0 %v944
    %1032 = vmatpush.bf16.msra.mxu0 %v942
    %1033 = vmatpush.bf16.msra.mxu0 %v940
    %1034 = vmatpush.bf16.msra.mxu0 %v938
    %1035 = vmatmul.bf16.gmra.mxu0 %v244
    %v1036 = vpop.f32.mrf.mxu0
    %v1037 = vadd.f32 %v1023, %v1036
    %v1038 = vpop.f32.mrf.mxu0
    %v1039 = vadd.f32 %v1025, %v1038
    %1040 = vdwg.mxu0
    %v1042 = vperm.slane %v146, 0
    %v1043 = vperm.slane %v146, 1
    %v1046 = vadd.f32 %v1009, %v1042
    %v1047 = vadd.f32 %v1037, %v1043
    %v1048 = vadd.f32 %v1011, %v1042
    %v1049 = vadd.f32 %v1039, %v1043
    %v1050 = vmax.f32 %v1046, 0.0
    %v1051 = vmax.f32 %v1047, 0.0
    %v1052 = vmax.f32 %v1048, 0.0
    %v1053 = vmax.f32 %v1049, 0.0
    %v1054 = vpack.c.bf16 %v1052, %v1050
    %v1055 = vpack.c.bf16 %v1053, %v1051
    %v1056 = vld [vmem:[#allocation13] sm:$0xff]
    %v1057 = vld [vmem:[#allocation13 + $0x8] sm:$0xff]
    %v1058 = vld [vmem:[#allocation13 + $0x10] sm:$0xff]
    %v1059 = vld [vmem:[#allocation13 + $0x18] sm:$0xff]
    %v1060 = vld [vmem:[#allocation13 + $0x20] sm:$0xff]
    %v1061 = vld [vmem:[#allocation13 + $0x28] sm:$0xff]
    %v1062 = vld [vmem:[#allocation13 + $0x30] sm:$0xff]
    %v1063 = vld [vmem:[#allocation13 + $0x38] sm:$0xff]
    %v1064 = vld [vmem:[#allocation13 + $0x40] sm:$0xff]
    %v1065 = vld [vmem:[#allocation13 + $0x48] sm:$0xff]
    %v1066 = vld [vmem:[#allocation13 + $0x50] sm:$0xff]
    %v1067 = vld [vmem:[#allocation13 + $0x58] sm:$0xff]
    %v1068 = vld [vmem:[#allocation13 + $0x60] sm:$0xff]
    %v1069 = vld [vmem:[#allocation13 + $0x68] sm:$0xff]
    %v1070 = vld [vmem:[#allocation13 + $0x70] sm:$0xff]
    %v1071 = vld [vmem:[#allocation13 + $0x78] sm:$0xff]
    %v1072 = vld [vmem:[#allocation13 + $0x80] sm:$0xff]
    %v1073 = vld [vmem:[#allocation13 + $0x88] sm:$0xff]
    %v1074 = vld [vmem:[#allocation13 + $0x90] sm:$0xff]
    %v1075 = vld [vmem:[#allocation13 + $0x98] sm:$0xff]
    %v1076 = vld [vmem:[#allocation13 + $0xa0] sm:$0xff]
    %v1077 = vld [vmem:[#allocation13 + $0xa8] sm:$0xff]
    %v1078 = vld [vmem:[#allocation13 + $0xb0] sm:$0xff]
    %v1079 = vld [vmem:[#allocation13 + $0xb8] sm:$0xff]
    %v1080 = vld [vmem:[#allocation13 + $0xc0] sm:$0xff]
    %v1081 = vld [vmem:[#allocation13 + $0xc8] sm:$0xff]
    %v1082 = vld [vmem:[#allocation13 + $0xd0] sm:$0xff]
    %v1083 = vld [vmem:[#allocation13 + $0xd8] sm:$0xff]
    %v1084 = vld [vmem:[#allocation13 + $0xe0] sm:$0xff]
    %v1085 = vld [vmem:[#allocation13 + $0xe8] sm:$0xff]
    %v1086 = vld [vmem:[#allocation13 + $0xf0] sm:$0xff]
    %v1087 = vld [vmem:[#allocation13 + $0xf8] sm:$0xff]
    %v1089 = vperm.slane %v148, 0
    %v1090 = vperm.slane %v148, 1
    %v1125 = vunpack.c.l.b16 %v1056
    %v1126 = vunpack.c.h.b16 %v1056
    %v1127 = vunpack.c.l.b16 %v1057
    %v1128 = vunpack.c.h.b16 %v1057
    %v1129 = vunpack.c.l.b16 %v1058
    %v1130 = vunpack.c.h.b16 %v1058
    %v1131 = vunpack.c.l.b16 %v1059
    %v1132 = vunpack.c.h.b16 %v1059
    %v1133 = vunpack.c.l.b16 %v1060
    %v1134 = vunpack.c.h.b16 %v1060
    %v1135 = vunpack.c.l.b16 %v1061
    %v1136 = vunpack.c.h.b16 %v1061
    %v1137 = vunpack.c.l.b16 %v1062
    %v1138 = vunpack.c.h.b16 %v1062
    %v1139 = vunpack.c.l.b16 %v1063
    %v1140 = vunpack.c.h.b16 %v1063
    %v1141 = vunpack.c.l.b16 %v1064
    %v1142 = vunpack.c.h.b16 %v1064
    %v1143 = vunpack.c.l.b16 %v1065
    %v1144 = vunpack.c.h.b16 %v1065
    %v1145 = vunpack.c.l.b16 %v1066
    %v1146 = vunpack.c.h.b16 %v1066
    %v1147 = vunpack.c.l.b16 %v1067
    %v1148 = vunpack.c.h.b16 %v1067
    %v1149 = vunpack.c.l.b16 %v1068
    %v1150 = vunpack.c.h.b16 %v1068
    %v1151 = vunpack.c.l.b16 %v1069
    %v1152 = vunpack.c.h.b16 %v1069
    %v1153 = vunpack.c.l.b16 %v1070
    %v1154 = vunpack.c.h.b16 %v1070
    %v1155 = vunpack.c.l.b16 %v1071
    %v1156 = vunpack.c.h.b16 %v1071
    %v1157 = vunpack.c.l.b16 %v1072
    %v1158 = vunpack.c.h.b16 %v1072
    %v1159 = vunpack.c.l.b16 %v1073
    %v1160 = vunpack.c.h.b16 %v1073
    %v1161 = vunpack.c.l.b16 %v1074
    %v1162 = vunpack.c.h.b16 %v1074
    %v1163 = vunpack.c.l.b16 %v1075
    %v1164 = vunpack.c.h.b16 %v1075
    %v1165 = vunpack.c.l.b16 %v1076
    %v1166 = vunpack.c.h.b16 %v1076
    %v1167 = vunpack.c.l.b16 %v1077
    %v1168 = vunpack.c.h.b16 %v1077
    %v1169 = vunpack.c.l.b16 %v1078
    %v1170 = vunpack.c.h.b16 %v1078
    %v1171 = vunpack.c.l.b16 %v1079
    %v1172 = vunpack.c.h.b16 %v1079
    %v1173 = vunpack.c.l.b16 %v1080
    %v1174 = vunpack.c.h.b16 %v1080
    %v1175 = vunpack.c.l.b16 %v1081
    %v1176 = vunpack.c.h.b16 %v1081
    %v1177 = vunpack.c.l.b16 %v1082
    %v1178 = vunpack.c.h.b16 %v1082
    %v1179 = vunpack.c.l.b16 %v1083
    %v1180 = vunpack.c.h.b16 %v1083
    %v1181 = vunpack.c.l.b16 %v1084
    %v1182 = vunpack.c.h.b16 %v1084
    %v1183 = vunpack.c.l.b16 %v1085
    %v1184 = vunpack.c.h.b16 %v1085
    %v1185 = vunpack.c.l.b16 %v1086
    %v1186 = vunpack.c.h.b16 %v1086
    %v1187 = vunpack.c.l.b16 %v1087
    %v1188 = vunpack.c.h.b16 %v1087
    %v1189 = vpack.c.b16 %v1127, %v1125
    %v1190 = vpack.c.b16 %v1128, %v1126
    %v1191 = vpack.c.b16 %v1131, %v1129
    %v1192 = vpack.c.b16 %v1132, %v1130
    %v1193 = vpack.c.b16 %v1135, %v1133
    %v1194 = vpack.c.b16 %v1136, %v1134
    %v1195 = vpack.c.b16 %v1139, %v1137
    %v1196 = vpack.c.b16 %v1140, %v1138
    %v1197 = vpack.c.b16 %v1143, %v1141
    %v1198 = vpack.c.b16 %v1144, %v1142
    %v1199 = vpack.c.b16 %v1147, %v1145
    %v1200 = vpack.c.b16 %v1148, %v1146
    %v1201 = vpack.c.b16 %v1151, %v1149
    %v1202 = vpack.c.b16 %v1152, %v1150
    %v1203 = vpack.c.b16 %v1155, %v1153
    %v1204 = vpack.c.b16 %v1156, %v1154
    %v1205 = vpack.c.b16 %v1159, %v1157
    %v1206 = vpack.c.b16 %v1160, %v1158
    %v1207 = vpack.c.b16 %v1163, %v1161
    %v1208 = vpack.c.b16 %v1164, %v1162
    %v1209 = vpack.c.b16 %v1167, %v1165
    %v1210 = vpack.c.b16 %v1168, %v1166
    %v1211 = vpack.c.b16 %v1171, %v1169
    %v1212 = vpack.c.b16 %v1172, %v1170
    %v1213 = vpack.c.b16 %v1175, %v1173
    %v1214 = vpack.c.b16 %v1176, %v1174
    %v1215 = vpack.c.b16 %v1179, %v1177
    %v1216 = vpack.c.b16 %v1180, %v1178
    %v1217 = vpack.c.b16 %v1183, %v1181
    %v1218 = vpack.c.b16 %v1184, %v1182
    %v1219 = vpack.c.b16 %v1187, %v1185
    %v1220 = vpack.c.b16 %v1188, %v1186
    %1253 = vmatpush.bf16.msra.mxu0 %v1203
    %1254 = vmatpush.bf16.msra.mxu0 %v1201
    %1255 = vmatpush.bf16.msra.mxu0 %v1199
    %1256 = vmatpush.bf16.msra.mxu0 %v1197
    %1257 = vmatpush.bf16.msra.mxu0 %v1195
    %1258 = vmatpush.bf16.msra.mxu0 %v1193
    %1259 = vmatpush.bf16.msra.mxu0 %v1191
    %1260 = vmatpush.bf16.msra.mxu0 %v1189
    %1261 = vmatmul.bf16.gmra.mxu0 %v1054
    %v1262 = vpop.f32.mrf.mxu0
    %v1263 = vadd.f32 %v1089, %v1262
    %v1264 = vpop.f32.mrf.mxu0
    %v1265 = vadd.f32 %v1089, %v1264
    %1266 = vdwg.mxu0
    %1267 = vmatpush.bf16.msra.mxu0 %v1219
    %1268 = vmatpush.bf16.msra.mxu0 %v1217
    %1269 = vmatpush.bf16.msra.mxu0 %v1215
    %1270 = vmatpush.bf16.msra.mxu0 %v1213
    %1271 = vmatpush.bf16.msra.mxu0 %v1211
    %1272 = vmatpush.bf16.msra.mxu0 %v1209
    %1273 = vmatpush.bf16.msra.mxu0 %v1207
    %1274 = vmatpush.bf16.msra.mxu0 %v1205
    %1275 = vmatmul.bf16.gmra.mxu0 %v1055
    %v1276 = vpop.f32.mrf.mxu0
    %v1277 = vadd.f32 %v1263, %v1276
    %v1278 = vpop.f32.mrf.mxu0
    %v1279 = vadd.f32 %v1265, %v1278
    %1280 = vdwg.mxu0
    %1281 = vmatpush.bf16.msra.mxu0 %v1204
    %1282 = vmatpush.bf16.msra.mxu0 %v1202
    %1283 = vmatpush.bf16.msra.mxu0 %v1200
    %1284 = vmatpush.bf16.msra.mxu0 %v1198
    %1285 = vmatpush.bf16.msra.mxu0 %v1196
    %1286 = vmatpush.bf16.msra.mxu0 %v1194
    %1287 = vmatpush.bf16.msra.mxu0 %v1192
    %1288 = vmatpush.bf16.msra.mxu0 %v1190
    %1289 = vmatmul.bf16.gmra.mxu0 %v1054
    %v1290 = vpop.f32.mrf.mxu0
    %v1291 = vadd.f32 %v1090, %v1290
    %v1292 = vpop.f32.mrf.mxu0
    %v1293 = vadd.f32 %v1090, %v1292
    %1294 = vdwg.mxu0
    %1295 = vmatpush.bf16.msra.mxu0 %v1220
    %1296 = vmatpush.bf16.msra.mxu0 %v1218
    %1297 = vmatpush.bf16.msra.mxu0 %v1216
    %1298 = vmatpush.bf16.msra.mxu0 %v1214
    %1299 = vmatpush.bf16.msra.mxu0 %v1212
    %1300 = vmatpush.bf16.msra.mxu0 %v1210
    %1301 = vmatpush.bf16.msra.mxu0 %v1208
    %1302 = vmatpush.bf16.msra.mxu0 %v1206
    %1303 = vmatmul.bf16.gmra.mxu0 %v1055
    %v1304 = vpop.f32.mrf.mxu0
    %v1305 = vadd.f32 %v1291, %v1304
    %v1306 = vpop.f32.mrf.mxu0
    %v1307 = vadd.f32 %v1293, %v1306
    %1308 = vdwg.mxu0
    %1309 = vst [vmem:[#allocation14] sm:$0xff] %v1277
    %1310 = vst [vmem:[#allocation14 + $0x8] sm:$0xff] %v1305
    %1311 = vst [vmem:[#allocation14 + $0x10] sm:$0xff] %v1279
    %1312 = vst [vmem:[#allocation14 + $0x18] sm:$0xff] %v1307
    // Predicated region
    $region66: #{tpu_custom_call.1} parent=1 // pred_check
      _
    $region67: #{tpu_custom_call.1} parent=1 // pred_check_branch
      %1314 = sbr.rel (0) target = $region69
    $region68: #{tpu_custom_call.1} parent=1 // pred_region
      %1316 = vsyncadd [#allocation4], 0
      %s1317 = sshll.u32 [#allocation14], 4
      %s1318 = int_to_ptr.vmem [resolvable:$true] %s1317
      %s1319 = sshll.u32 %s9, 4
      %s1320 = int_to_ptr.hbm [resolvable:$true] %s1319
      %1325 = dma.vmem_to_hbm [thread:$0]  %s1318, 512, %s1320, [#allocation4], 256, 256, 16
    $region69: #{tpu_custom_call.1} parent=1 // pred_fallthru
      _
    // Predicated region
    $region70: #{tpu_custom_call.1} parent=1 // pred_check
      _
    $region71: #{tpu_custom_call.1} parent=1 // pred_check_branch
      %1327 = sbr.rel (0) target = $region73
    $region72: #{tpu_custom_call.1} parent=1 // pred_region
      %1329 = dma.done [#allocation4], 512
    $region73: #{tpu_custom_call.1} parent=1 // pred_fallthru
      _
    %1330 = vsyncpa [#allocation3], 1
    %1331 = vsyncpa [#allocation6], 1
    %1332 = vsyncpa [#allocation9], 1
    %1333 = vsyncpa [#allocation12], 1
    %1334 = vsyncpa [#allocation4], 1

</llo_original>
